<compile_context>
chip_gen: v6e
topology: v6e:2x2x1
jax: 0.10.0
libtpu: 0.0.40
codegen_flags: <defaults>
</compile_context>

<pallas_src>
import functools

import jax
import jax.numpy as jnp
from jax.experimental import pallas as pl
from jax.experimental.pallas import tpu as pltpu  # noqa: F401  (TPU backend)


def bn_relu_kernel(x_ref, gamma_ref, beta_ref, o_ref, *, eps, inv_l):
    # x_ref:     (N, C, HW) f32 -- channels on the sublane axis, HW on lanes
    # gamma_ref: (C, 1)     f32 -- broadcasts along lanes against (N, C, HW)
    # beta_ref:  (C, 1)     f32
    # o_ref:     (N, C, HW) f32
    x = x_ref[...]

    gamma = gamma_ref[...]                        # (C, 1)
    beta = beta_ref[...]                          # (C, 1)

    # --- Two-pass batch statistics (biased variance, training-mode BN) ---
    s = jnp.sum(x, axis=2, keepdims=True)         # (N, C, 1): lane (XLU) reduce
    s = jnp.sum(s, axis=0, keepdims=True)         # (1, C, 1)
    mean = s * inv_l                              # inv_l = 1/(N*H*W), static

    d = x - mean                                  # centered activations
    v = jnp.sum(d * d, axis=2, keepdims=True)     # (N, C, 1)
    v = jnp.sum(v, axis=0, keepdims=True)         # (1, C, 1)
    var = v * inv_l                               # biased variance, >= 0

    scale = gamma * jax.lax.rsqrt(var + eps)      # (1, C, 1), rsqrt on EUP

    # Normalize + affine + ReLU in one fused VPU pass, stored in-place layout.
    o_ref[...] = jnp.maximum(d * scale + beta, 0.0)


@functools.partial(jax.jit, static_argnames=("eps",))
def batchnorm_relu(x_nchw, gamma, beta, eps=1e-5):
    """x_nchw: (N, C, H, W) f32; gamma, beta: (C,) f32. Training-mode BN + ReLU."""
    N, C, H, W = x_nchw.shape
    HW = H * W
    L = N * HW

    # Metadata-only reshapes: no transposes, no extra HBM traffic.
    x3d = x_nchw.reshape(N, C, HW)
    g2d = gamma.reshape(C, 1).astype(x3d.dtype)
    b2d = beta.reshape(C, 1).astype(x3d.dtype)

    cost = pl.CostEstimate(
        flops=10 * L * C,                 # sums, center, square, normalize, relu
        transcendentals=C,                # per-channel rsqrt
        bytes_accessed=(2 * L * C + 2 * C) * 4,
    )

    out3d = pl.pallas_call(
        functools.partial(bn_relu_kernel, eps=eps, inv_l=1.0 / L),
        out_shape=jax.ShapeDtypeStruct((N, C, HW), x3d.dtype),
        in_specs=[
            pl.BlockSpec((N, C, HW), lambda: (0, 0, 0)),
            pl.BlockSpec((C, 1), lambda: (0, 0)),
            pl.BlockSpec((C, 1), lambda: (0, 0)),
        ],
        out_specs=pl.BlockSpec((N, C, HW), lambda: (0, 0, 0)),
        cost_estimate=cost,
    )(x3d, g2d, b2d)

    # Metadata-only reshape back to NCHW.
    return out3d.reshape(N, C, H, W)


if __name__ == "__main__":
    key = jax.random.PRNGKey(0)
    N, C, H, W = 1, 128, 7, 7                       # matches the module spec
    x = jax.random.normal(key, (N, C, H, W), dtype=jnp.float32)

    # nn.BatchNorm2d default init: weight (gamma) = ones, bias (beta) = zeros.
    gamma = jnp.ones((C,), dtype=jnp.float32)
    beta = jnp.zeros((C,), dtype=jnp.float32)

    out = batchnorm_relu(x, gamma, beta)
    out = jax.block_until_ready(out)

    # Pure-JAX reference (training-mode BN forward + ReLU, biased variance).
    mean = jnp.mean(x, axis=(0, 2, 3), keepdims=True)
    var = jnp.mean((x - mean) ** 2, axis=(0, 2, 3), keepdims=True)
    ref = jnp.maximum((x - mean) * jax.lax.rsqrt(var + 1e-5), 0.0)

    assert out.shape == (N, C, H, W)
    assert jnp.allclose(out, ref, atol=1e-5, rtol=1e-4)

    print("KERNEL_OK")
</pallas_src>

<mosaic_0001>
module attributes {stable_mosaic.version = 11 : i64} {
  func.func @bn_relu_kernel(%arg0: memref<1x128x49xf32, #tpu.memory_space<vmem>>, %arg1: memref<128x1xf32, #tpu.memory_space<vmem>>, %arg2: memref<128x1xf32, #tpu.memory_space<vmem>>, %arg3: memref<1x128x49xf32, #tpu.memory_space<vmem>>) attributes {dimension_semantics = [], scalar_prefetch = 0 : i64, scratch_operands = 0 : i64, tpu.core_type = #tpu.core_type<tc>} {
    %c0 = arith.constant 0 : index
    %c0_0 = arith.constant 0 : index
    %c0_1 = arith.constant 0 : index
    %0 = vector.load %arg0[%c0, %c0_0, %c0_1] : memref<1x128x49xf32, #tpu.memory_space<vmem>>, vector<1x128x49xf32>
    %c0_2 = arith.constant 0 : index
    %c0_3 = arith.constant 0 : index
    %1 = vector.load %arg1[%c0_2, %c0_3] : memref<128x1xf32, #tpu.memory_space<vmem>>, vector<128x1xf32>
    %c0_4 = arith.constant 0 : index
    %c0_5 = arith.constant 0 : index
    %2 = vector.load %arg2[%c0_4, %c0_5] : memref<128x1xf32, #tpu.memory_space<vmem>>, vector<128x1xf32>
    %cst = arith.constant dense<0.000000e+00> : vector<1x128xf32>
    %3 = vector.multi_reduction <add>, %0, %cst [2] : vector<1x128x49xf32> to vector<1x128xf32>
    %4 = vector.shape_cast %3 : vector<1x128xf32> to vector<1x128x1xf32>
    %cst_6 = arith.constant dense<0.000000e+00> : vector<128x1xf32>
    %5 = vector.multi_reduction <add>, %4, %cst_6 [0] : vector<1x128x1xf32> to vector<128x1xf32>
    %6 = vector.shape_cast %5 : vector<128x1xf32> to vector<1x128x1xf32>
    %cst_7 = arith.constant 0.0204081628 : f32
    %7 = vector.broadcast %cst_7 : f32 to vector<1x128x1xf32>
    %8 = arith.mulf %6, %7 : vector<1x128x1xf32>
    %9 = vector.broadcast %8 : vector<1x128x1xf32> to vector<1x128x49xf32>
    %10 = arith.subf %0, %9 : vector<1x128x49xf32>
    %11 = arith.mulf %10, %10 : vector<1x128x49xf32>
    %cst_8 = arith.constant dense<0.000000e+00> : vector<1x128xf32>
    %12 = vector.multi_reduction <add>, %11, %cst_8 [2] : vector<1x128x49xf32> to vector<1x128xf32>
    %13 = vector.shape_cast %12 : vector<1x128xf32> to vector<1x128x1xf32>
    %cst_9 = arith.constant dense<0.000000e+00> : vector<128x1xf32>
    %14 = vector.multi_reduction <add>, %13, %cst_9 [0] : vector<1x128x1xf32> to vector<128x1xf32>
    %15 = vector.shape_cast %14 : vector<128x1xf32> to vector<1x128x1xf32>
    %cst_10 = arith.constant 0.0204081628 : f32
    %16 = vector.broadcast %cst_10 : f32 to vector<1x128x1xf32>
    %17 = arith.mulf %15, %16 : vector<1x128x1xf32>
    %cst_11 = arith.constant 9.99999974E-6 : f32
    %18 = vector.broadcast %cst_11 : f32 to vector<1x128x1xf32>
    %19 = arith.addf %17, %18 : vector<1x128x1xf32>
    %20 = math.rsqrt %19 : vector<1x128x1xf32>
    %21 = vector.shape_cast %1 : vector<128x1xf32> to vector<1x128x1xf32>
    %22 = arith.mulf %21, %20 : vector<1x128x1xf32>
    %23 = vector.broadcast %22 : vector<1x128x1xf32> to vector<1x128x49xf32>
    %24 = arith.mulf %10, %23 : vector<1x128x49xf32>
    %25 = vector.shape_cast %2 : vector<128x1xf32> to vector<1x128x1xf32>
    %26 = vector.broadcast %25 : vector<1x128x1xf32> to vector<1x128x49xf32>
    %27 = arith.addf %24, %26 : vector<1x128x49xf32>
    %cst_12 = arith.constant 0.000000e+00 : f32
    %28 = vector.broadcast %cst_12 : f32 to vector<1x128x49xf32>
    %29 = arith.maximumf %27, %28 : vector<1x128x49xf32>
    %c0_13 = arith.constant 0 : index
    %c0_14 = arith.constant 0 : index
    %c0_15 = arith.constant 0 : index
    %30 = vector.load %arg3[%c0_13, %c0_14, %c0_15] : memref<1x128x49xf32, #tpu.memory_space<vmem>>, vector<1x128x49xf32>
    tpu.vector_store %arg3[%c0_13, %c0_14, %c0_15], %29 {strides = array<i32>} : memref<1x128x49xf32, #tpu.memory_space<vmem>>, vector<1x128x49xf32>,
    return
  }
}

</mosaic_0001>

<llo_original>
// kernel: batchnorm_relu.1
$region0: #{batchnorm_relu.1}
  #allocation0 [shape = 'u32[]', space=smem, size = 0x4, offset = 0x4, fixed_abs, tag = 'smem constant byte address 0x4 - core index']
  #allocation1 [shape = 'u32[144,128]{1,0:T(1,128)}', space=vmem, size = 0x12000, scoped, tag = 'internal scratch']
  %s0 = inlined_call_operand.vmem [shape: f32[1,128,49], index: 0, kind: input, shape index: {}]
  %s1 = inlined_call_operand.vmem [shape: f32[128,1], index: 1, kind: input, shape index: {}]
  %s2 = inlined_call_operand.vmem [shape: f32[128,1], index: 2, kind: input, shape index: {}]
  %s3 = inlined_call_operand.vmem [shape: f32[1,128,49], index: 3, kind: output, shape index: {}]
  %s4 = sld [smem:[#allocation0]]
  $region22: #{batchnorm_relu.1} parent=0
    _
  %s6 = ssub.s32 1, %s4
  %s7 = scalar_select 0, %s6, %s4
  // Predicated region
  $region2: #{batchnorm_relu.1} parent=0 // pred_check
    _
  $region3: #{batchnorm_relu.1} parent=0 // pred_check_branch
    %9 = sbr.rel (0) target = $region5
  $region4: #{batchnorm_relu.1} parent=0 // pred_region
    _
  $region5: #{batchnorm_relu.1} parent=0 // pred_fallthru
    _
  // Predicated region
  $region6: #{batchnorm_relu.1} parent=0 // pred_check
    _
  $region7: #{batchnorm_relu.1} parent=0 // pred_check_branch
    %11 = sbr.rel (0) target = $region9
  $region8: #{batchnorm_relu.1} parent=0 // pred_region
    _
  $region9: #{batchnorm_relu.1} parent=0 // pred_fallthru
    _
  // Predicated region
  $region10: #{batchnorm_relu.1} parent=0 // pred_check
    _
  $region11: #{batchnorm_relu.1} parent=0 // pred_check_branch
    %13 = sbr.rel (0) target = $region13
  $region12: #{batchnorm_relu.1} parent=0 // pred_region
    _
  $region13: #{batchnorm_relu.1} parent=0 // pred_fallthru
    _
  %v14 = vld [vmem:[%s0] sm:$0xff]
  %v15 = vld [vmem:[%s0 + $0x8] sm:$0xff]
  %v16 = vld [vmem:[%s0 + $0x10] sm:$0xff]
  %v17 = vld [vmem:[%s0 + $0x18] sm:$0xff]
  %v18 = vld [vmem:[%s0 + $0x20] sm:$0xff]
  %v19 = vld [vmem:[%s0 + $0x28] sm:$0xff]
  %v20 = vld [vmem:[%s0 + $0x30] sm:$0xff]
  %v21 = vld [vmem:[%s0 + $0x38] sm:$0xff]
  %v22 = vld [vmem:[%s0 + $0x40] sm:$0xff]
  %v23 = vld [vmem:[%s0 + $0x48] sm:$0xff]
  %v24 = vld [vmem:[%s0 + $0x50] sm:$0xff]
  %v25 = vld [vmem:[%s0 + $0x58] sm:$0xff]
  %v26 = vld [vmem:[%s0 + $0x60] sm:$0xff]
  %v27 = vld [vmem:[%s0 + $0x68] sm:$0xff]
  %v28 = vld [vmem:[%s0 + $0x70] sm:$0xff]
  %v29 = vld [vmem:[%s0 + $0x78] sm:$0xff]
  %v30 = vld [vmem:[%s1] sm:$0xff]
  %v31 = vld [vmem:[%s1 + $0x8] sm:$0xff]
  %v32 = vld [vmem:[%s1 + $0x10] sm:$0xff]
  %v33 = vld [vmem:[%s1 + $0x18] sm:$0xff]
  %v34 = vld [vmem:[%s1 + $0x20] sm:$0xff]
  %v35 = vld [vmem:[%s1 + $0x28] sm:$0xff]
  %v36 = vld [vmem:[%s1 + $0x30] sm:$0xff]
  %v37 = vld [vmem:[%s1 + $0x38] sm:$0xff]
  %v38 = vld [vmem:[%s1 + $0x40] sm:$0xff]
  %v39 = vld [vmem:[%s1 + $0x48] sm:$0xff]
  %v40 = vld [vmem:[%s1 + $0x50] sm:$0xff]
  %v41 = vld [vmem:[%s1 + $0x58] sm:$0xff]
  %v42 = vld [vmem:[%s1 + $0x60] sm:$0xff]
  %v43 = vld [vmem:[%s1 + $0x68] sm:$0xff]
  %v44 = vld [vmem:[%s1 + $0x70] sm:$0xff]
  %v45 = vld [vmem:[%s1 + $0x78] sm:$0xff]
  %v46 = vld [vmem:[%s2] sm:$0xff]
  %v47 = vld [vmem:[%s2 + $0x8] sm:$0xff]
  %v48 = vld [vmem:[%s2 + $0x10] sm:$0xff]
  %v49 = vld [vmem:[%s2 + $0x18] sm:$0xff]
  %v50 = vld [vmem:[%s2 + $0x20] sm:$0xff]
  %v51 = vld [vmem:[%s2 + $0x28] sm:$0xff]
  %v52 = vld [vmem:[%s2 + $0x30] sm:$0xff]
  %v53 = vld [vmem:[%s2 + $0x38] sm:$0xff]
  %v54 = vld [vmem:[%s2 + $0x40] sm:$0xff]
  %v55 = vld [vmem:[%s2 + $0x48] sm:$0xff]
  %v56 = vld [vmem:[%s2 + $0x50] sm:$0xff]
  %v57 = vld [vmem:[%s2 + $0x58] sm:$0xff]
  %v58 = vld [vmem:[%s2 + $0x60] sm:$0xff]
  %v59 = vld [vmem:[%s2 + $0x68] sm:$0xff]
  %v60 = vld [vmem:[%s2 + $0x70] sm:$0xff]
  %v61 = vld [vmem:[%s2 + $0x78] sm:$0xff]
  %vm62 = vcmask 400384
  %v63 = vsel %vm62, %v14, 0.0
  %64 = vadd.xlane.f32.xlu0 %v63
  %v65 = vpop.xlane.xlu0 %64
  %v66 = vsel %vm62, %v15, 0.0
  %67 = vadd.xlane.f32.xlu0 %v66
  %v68 = vpop.xlane.xlu0 %67
  %v69 = vsel %vm62, %v16, 0.0
  %70 = vadd.xlane.f32.xlu0 %v69
  %v71 = vpop.xlane.xlu0 %70
  %v72 = vsel %vm62, %v17, 0.0
  %73 = vadd.xlane.f32.xlu0 %v72
  %v74 = vpop.xlane.xlu0 %73
  %v75 = vsel %vm62, %v18, 0.0
  %76 = vadd.xlane.f32.xlu0 %v75
  %v77 = vpop.xlane.xlu0 %76
  %v78 = vsel %vm62, %v19, 0.0
  %79 = vadd.xlane.f32.xlu0 %v78
  %v80 = vpop.xlane.xlu0 %79
  %v81 = vsel %vm62, %v20, 0.0
  %82 = vadd.xlane.f32.xlu0 %v81
  %v83 = vpop.xlane.xlu0 %82
  %v84 = vsel %vm62, %v21, 0.0
  %85 = vadd.xlane.f32.xlu0 %v84
  %v86 = vpop.xlane.xlu0 %85
  %v87 = vsel %vm62, %v22, 0.0
  %88 = vadd.xlane.f32.xlu0 %v87
  %v89 = vpop.xlane.xlu0 %88
  %v90 = vsel %vm62, %v23, 0.0
  %91 = vadd.xlane.f32.xlu0 %v90
  %v92 = vpop.xlane.xlu0 %91
  %v93 = vsel %vm62, %v24, 0.0
  %94 = vadd.xlane.f32.xlu0 %v93
  %v95 = vpop.xlane.xlu0 %94
  %v96 = vsel %vm62, %v25, 0.0
  %97 = vadd.xlane.f32.xlu0 %v96
  %v98 = vpop.xlane.xlu0 %97
  %v99 = vsel %vm62, %v26, 0.0
  %100 = vadd.xlane.f32.xlu0 %v99
  %v101 = vpop.xlane.xlu0 %100
  %v102 = vsel %vm62, %v27, 0.0
  %103 = vadd.xlane.f32.xlu0 %v102
  %v104 = vpop.xlane.xlu0 %103
  %v105 = vsel %vm62, %v28, 0.0
  %106 = vadd.xlane.f32.xlu0 %v105
  %v107 = vpop.xlane.xlu0 %106
  %v108 = vsel %vm62, %v29, 0.0
  %109 = vadd.xlane.f32.xlu0 %v108
  %v110 = vpop.xlane.xlu0 %109
  %v111 = vadd.f32 %v65, 0.0
  %v112 = vadd.f32 %v68, 0.0
  %v113 = vadd.f32 %v71, 0.0
  %v114 = vadd.f32 %v74, 0.0
  %v115 = vadd.f32 %v77, 0.0
  %v116 = vadd.f32 %v80, 0.0
  %v117 = vadd.f32 %v83, 0.0
  %v118 = vadd.f32 %v86, 0.0
  %v119 = vadd.f32 %v89, 0.0
  %v120 = vadd.f32 %v92, 0.0
  %v121 = vadd.f32 %v95, 0.0
  %v122 = vadd.f32 %v98, 0.0
  %v123 = vadd.f32 %v101, 0.0
  %v124 = vadd.f32 %v104, 0.0
  %v125 = vadd.f32 %v107, 0.0
  %v126 = vadd.f32 %v110, 0.0
  %v127 = vmul.f32 %v111, 0.020408163
  %v128 = vmul.f32 %v112, 0.020408163
  %v129 = vmul.f32 %v113, 0.020408163
  %v130 = vmul.f32 %v114, 0.020408163
  %v131 = vmul.f32 %v115, 0.020408163
  %v132 = vmul.f32 %v116, 0.020408163
  %v133 = vmul.f32 %v117, 0.020408163
  %v134 = vmul.f32 %v118, 0.020408163
  %v135 = vmul.f32 %v119, 0.020408163
  %v136 = vmul.f32 %v120, 0.020408163
  %v137 = vmul.f32 %v121, 0.020408163
  %v138 = vmul.f32 %v122, 0.020408163
  %v139 = vmul.f32 %v123, 0.020408163
  %v140 = vmul.f32 %v124, 0.020408163
  %v141 = vmul.f32 %v125, 0.020408163
  %v142 = vmul.f32 %v126, 0.020408163
  %v143 = vsub.f32 %v14, %v127
  %v144 = vsub.f32 %v15, %v128
  %v145 = vsub.f32 %v16, %v129
  %v146 = vsub.f32 %v17, %v130
  %v147 = vsub.f32 %v18, %v131
  %v148 = vsub.f32 %v19, %v132
  %v149 = vsub.f32 %v20, %v133
  %v150 = vsub.f32 %v21, %v134
  %v151 = vsub.f32 %v22, %v135
  %v152 = vsub.f32 %v23, %v136
  %v153 = vsub.f32 %v24, %v137
  %v154 = vsub.f32 %v25, %v138
  %v155 = vsub.f32 %v26, %v139
  %v156 = vsub.f32 %v27, %v140
  %v157 = vsub.f32 %v28, %v141
  %v158 = vsub.f32 %v29, %v142
  %v159 = vmul.f32 %v143, %v143
  %v160 = vmul.f32 %v144, %v144
  %v161 = vmul.f32 %v145, %v145
  %v162 = vmul.f32 %v146, %v146
  %v163 = vmul.f32 %v147, %v147
  %v164 = vmul.f32 %v148, %v148
  %v165 = vmul.f32 %v149, %v149
  %v166 = vmul.f32 %v150, %v150
  %v167 = vmul.f32 %v151, %v151
  %v168 = vmul.f32 %v152, %v152
  %v169 = vmul.f32 %v153, %v153
  %v170 = vmul.f32 %v154, %v154
  %v171 = vmul.f32 %v155, %v155
  %v172 = vmul.f32 %v156, %v156
  %v173 = vmul.f32 %v157, %v157
  %v174 = vmul.f32 %v158, %v158
  %v175 = vsel %vm62, %v159, 0.0
  %176 = vadd.xlane.f32.xlu0 %v175
  %v177 = vpop.xlane.xlu0 %176
  %v178 = vsel %vm62, %v160, 0.0
  %179 = vadd.xlane.f32.xlu0 %v178
  %v180 = vpop.xlane.xlu0 %179
  %v181 = vsel %vm62, %v161, 0.0
  %182 = vadd.xlane.f32.xlu0 %v181
  %v183 = vpop.xlane.xlu0 %182
  %v184 = vsel %vm62, %v162, 0.0
  %185 = vadd.xlane.f32.xlu0 %v184
  %v186 = vpop.xlane.xlu0 %185
  %v187 = vsel %vm62, %v163, 0.0
  %188 = vadd.xlane.f32.xlu0 %v187
  %v189 = vpop.xlane.xlu0 %188
  %v190 = vsel %vm62, %v164, 0.0
  %191 = vadd.xlane.f32.xlu0 %v190
  %v192 = vpop.xlane.xlu0 %191
  %v193 = vsel %vm62, %v165, 0.0
  %194 = vadd.xlane.f32.xlu0 %v193
  %v195 = vpop.xlane.xlu0 %194
  %v196 = vsel %vm62, %v166, 0.0
  %197 = vadd.xlane.f32.xlu0 %v196
  %v198 = vpop.xlane.xlu0 %197
  %v199 = vsel %vm62, %v167, 0.0
  %200 = vadd.xlane.f32.xlu0 %v199
  %v201 = vpop.xlane.xlu0 %200
  %v202 = vsel %vm62, %v168, 0.0
  %203 = vadd.xlane.f32.xlu0 %v202
  %v204 = vpop.xlane.xlu0 %203
  %v205 = vsel %vm62, %v169, 0.0
  %206 = vadd.xlane.f32.xlu0 %v205
  %v207 = vpop.xlane.xlu0 %206
  %v208 = vsel %vm62, %v170, 0.0
  %209 = vadd.xlane.f32.xlu0 %v208
  %v210 = vpop.xlane.xlu0 %209
  %v211 = vsel %vm62, %v171, 0.0
  %212 = vadd.xlane.f32.xlu0 %v211
  %v213 = vpop.xlane.xlu0 %212
  %v214 = vsel %vm62, %v172, 0.0
  %215 = vadd.xlane.f32.xlu0 %v214
  %v216 = vpop.xlane.xlu0 %215
  %v217 = vsel %vm62, %v173, 0.0
  %218 = vadd.xlane.f32.xlu0 %v217
  %v219 = vpop.xlane.xlu0 %218
  %v220 = vsel %vm62, %v174, 0.0
  %221 = vadd.xlane.f32.xlu0 %v220
  %v222 = vpop.xlane.xlu0 %221
  %v223 = vadd.f32 %v177, 0.0
  %v224 = vadd.f32 %v180, 0.0
  %v225 = vadd.f32 %v183, 0.0
  %v226 = vadd.f32 %v186, 0.0
  %v227 = vadd.f32 %v189, 0.0
  %v228 = vadd.f32 %v192, 0.0
  %v229 = vadd.f32 %v195, 0.0
  %v230 = vadd.f32 %v198, 0.0
  %v231 = vadd.f32 %v201, 0.0
  %v232 = vadd.f32 %v204, 0.0
  %v233 = vadd.f32 %v207, 0.0
  %v234 = vadd.f32 %v210, 0.0
  %v235 = vadd.f32 %v213, 0.0
  %v236 = vadd.f32 %v216, 0.0
  %v237 = vadd.f32 %v219, 0.0
  %v238 = vadd.f32 %v222, 0.0
  %v239 = vmul.f32 %v223, 0.020408163
  %v240 = vmul.f32 %v224, 0.020408163
  %v241 = vmul.f32 %v225, 0.020408163
  %v242 = vmul.f32 %v226, 0.020408163
  %v243 = vmul.f32 %v227, 0.020408163
  %v244 = vmul.f32 %v228, 0.020408163
  %v245 = vmul.f32 %v229, 0.020408163
  %v246 = vmul.f32 %v230, 0.020408163
  %v247 = vmul.f32 %v231, 0.020408163
  %v248 = vmul.f32 %v232, 0.020408163
  %v249 = vmul.f32 %v233, 0.020408163
  %v250 = vmul.f32 %v234, 0.020408163
  %v251 = vmul.f32 %v235, 0.020408163
  %v252 = vmul.f32 %v236, 0.020408163
  %v253 = vmul.f32 %v237, 0.020408163
  %v254 = vmul.f32 %v238, 0.020408163
  %v255 = vadd.f32 %v239, 1e-05
  %v256 = vadd.f32 %v240, 1e-05
  %v257 = vadd.f32 %v241, 1e-05
  %v258 = vadd.f32 %v242, 1e-05
  %v259 = vadd.f32 %v243, 1e-05
  %v260 = vadd.f32 %v244, 1e-05
  %v261 = vadd.f32 %v245, 1e-05
  %v262 = vadd.f32 %v246, 1e-05
  %v263 = vadd.f32 %v247, 1e-05
  %v264 = vadd.f32 %v248, 1e-05
  %v265 = vadd.f32 %v249, 1e-05
  %v266 = vadd.f32 %v250, 1e-05
  %v267 = vadd.f32 %v251, 1e-05
  %v268 = vadd.f32 %v252, 1e-05
  %v269 = vadd.f32 %v253, 1e-05
  %v270 = vadd.f32 %v254, 1e-05
  %v271 = vrsqrt.pop %v255
  %v272 = vrsqrt.pop %v256
  %v273 = vrsqrt.pop %v257
  %v274 = vrsqrt.pop %v258
  %v275 = vrsqrt.pop %v259
  %v276 = vrsqrt.pop %v260
  %v277 = vrsqrt.pop %v261
  %v278 = vrsqrt.pop %v262
  %v279 = vrsqrt.pop %v263
  %v280 = vrsqrt.pop %v264
  %v281 = vrsqrt.pop %v265
  %v282 = vrsqrt.pop %v266
  %v283 = vrsqrt.pop %v267
  %v284 = vrsqrt.pop %v268
  %v285 = vrsqrt.pop %v269
  %v286 = vrsqrt.pop %v270
  %v287 = vmul.f32 %v30, %v271
  %v288 = vmul.f32 %v31, %v272
  %v289 = vmul.f32 %v32, %v273
  %v290 = vmul.f32 %v33, %v274
  %v291 = vmul.f32 %v34, %v275
  %v292 = vmul.f32 %v35, %v276
  %v293 = vmul.f32 %v36, %v277
  %v294 = vmul.f32 %v37, %v278
  %v295 = vmul.f32 %v38, %v279
  %v296 = vmul.f32 %v39, %v280
  %v297 = vmul.f32 %v40, %v281
  %v298 = vmul.f32 %v41, %v282
  %v299 = vmul.f32 %v42, %v283
  %v300 = vmul.f32 %v43, %v284
  %v301 = vmul.f32 %v44, %v285
  %v302 = vmul.f32 %v45, %v286
  %304 = vset.pattern.permute.xlu0 0
  %305 = vperm.xlu0 %304, %v287
  %v306 = vpop.permute.xlu0 %305
  %309 = vset.pattern.permute.xlu0 0
  %310 = vperm.xlu0 %309, %v288
  %v311 = vpop.permute.xlu0 %310
  %314 = vset.pattern.permute.xlu0 0
  %315 = vperm.xlu0 %314, %v289
  %v316 = vpop.permute.xlu0 %315
  %319 = vset.pattern.permute.xlu0 0
  %320 = vperm.xlu0 %319, %v290
  %v321 = vpop.permute.xlu0 %320
  %324 = vset.pattern.permute.xlu0 0
  %325 = vperm.xlu0 %324, %v291
  %v326 = vpop.permute.xlu0 %325
  %329 = vset.pattern.permute.xlu0 0
  %330 = vperm.xlu0 %329, %v292
  %v331 = vpop.permute.xlu0 %330
  %334 = vset.pattern.permute.xlu0 0
  %335 = vperm.xlu0 %334, %v293
  %v336 = vpop.permute.xlu0 %335
  %339 = vset.pattern.permute.xlu0 0
  %340 = vperm.xlu0 %339, %v294
  %v341 = vpop.permute.xlu0 %340
  %344 = vset.pattern.permute.xlu0 0
  %345 = vperm.xlu0 %344, %v295
  %v346 = vpop.permute.xlu0 %345
  %349 = vset.pattern.permute.xlu0 0
  %350 = vperm.xlu0 %349, %v296
  %v351 = vpop.permute.xlu0 %350
  %354 = vset.pattern.permute.xlu0 0
  %355 = vperm.xlu0 %354, %v297
  %v356 = vpop.permute.xlu0 %355
  %359 = vset.pattern.permute.xlu0 0
  %360 = vperm.xlu0 %359, %v298
  %v361 = vpop.permute.xlu0 %360
  %364 = vset.pattern.permute.xlu0 0
  %365 = vperm.xlu0 %364, %v299
  %v366 = vpop.permute.xlu0 %365
  %369 = vset.pattern.permute.xlu0 0
  %370 = vperm.xlu0 %369, %v300
  %v371 = vpop.permute.xlu0 %370
  %374 = vset.pattern.permute.xlu0 0
  %375 = vperm.xlu0 %374, %v301
  %v376 = vpop.permute.xlu0 %375
  %379 = vset.pattern.permute.xlu0 0
  %380 = vperm.xlu0 %379, %v302
  %v381 = vpop.permute.xlu0 %380
  %v383 = vmul.f32 %v143, %v306
  %v384 = vmul.f32 %v144, %v311
  %v385 = vmul.f32 %v145, %v316
  %v386 = vmul.f32 %v146, %v321
  %v387 = vmul.f32 %v147, %v326
  %v388 = vmul.f32 %v148, %v331
  %v389 = vmul.f32 %v149, %v336
  %v390 = vmul.f32 %v150, %v341
  %v391 = vmul.f32 %v151, %v346
  %v392 = vmul.f32 %v152, %v351
  %v393 = vmul.f32 %v153, %v356
  %v394 = vmul.f32 %v154, %v361
  %v395 = vmul.f32 %v155, %v366
  %v396 = vmul.f32 %v156, %v371
  %v397 = vmul.f32 %v157, %v376
  %v398 = vmul.f32 %v158, %v381
  %400 = vset.pattern.permute.xlu0 0
  %401 = vperm.xlu0 %400, %v46
  %v402 = vpop.permute.xlu0 %401
  %405 = vset.pattern.permute.xlu0 0
  %406 = vperm.xlu0 %405, %v47
  %v407 = vpop.permute.xlu0 %406
  %410 = vset.pattern.permute.xlu0 0
  %411 = vperm.xlu0 %410, %v48
  %v412 = vpop.permute.xlu0 %411
  %415 = vset.pattern.permute.xlu0 0
  %416 = vperm.xlu0 %415, %v49
  %v417 = vpop.permute.xlu0 %416
  %420 = vset.pattern.permute.xlu0 0
  %421 = vperm.xlu0 %420, %v50
  %v422 = vpop.permute.xlu0 %421
  %425 = vset.pattern.permute.xlu0 0
  %426 = vperm.xlu0 %425, %v51
  %v427 = vpop.permute.xlu0 %426
  %430 = vset.pattern.permute.xlu0 0
  %431 = vperm.xlu0 %430, %v52
  %v432 = vpop.permute.xlu0 %431
  %435 = vset.pattern.permute.xlu0 0
  %436 = vperm.xlu0 %435, %v53
  %v437 = vpop.permute.xlu0 %436
  %440 = vset.pattern.permute.xlu0 0
  %441 = vperm.xlu0 %440, %v54
  %v442 = vpop.permute.xlu0 %441
  %445 = vset.pattern.permute.xlu0 0
  %446 = vperm.xlu0 %445, %v55
  %v447 = vpop.permute.xlu0 %446
  %450 = vset.pattern.permute.xlu0 0
  %451 = vperm.xlu0 %450, %v56
  %v452 = vpop.permute.xlu0 %451
  %455 = vset.pattern.permute.xlu0 0
  %456 = vperm.xlu0 %455, %v57
  %v457 = vpop.permute.xlu0 %456
  %460 = vset.pattern.permute.xlu0 0
  %461 = vperm.xlu0 %460, %v58
  %v462 = vpop.permute.xlu0 %461
  %465 = vset.pattern.permute.xlu0 0
  %466 = vperm.xlu0 %465, %v59
  %v467 = vpop.permute.xlu0 %466
  %470 = vset.pattern.permute.xlu0 0
  %471 = vperm.xlu0 %470, %v60
  %v472 = vpop.permute.xlu0 %471
  %475 = vset.pattern.permute.xlu0 0
  %476 = vperm.xlu0 %475, %v61
  %v477 = vpop.permute.xlu0 %476
  %v479 = vadd.f32 %v383, %v402
  %v480 = vadd.f32 %v384, %v407
  %v481 = vadd.f32 %v385, %v412
  %v482 = vadd.f32 %v386, %v417
  %v483 = vadd.f32 %v387, %v422
  %v484 = vadd.f32 %v388, %v427
  %v485 = vadd.f32 %v389, %v432
  %v486 = vadd.f32 %v390, %v437
  %v487 = vadd.f32 %v391, %v442
  %v488 = vadd.f32 %v392, %v447
  %v489 = vadd.f32 %v393, %v452
  %v490 = vadd.f32 %v394, %v457
  %v491 = vadd.f32 %v395, %v462
  %v492 = vadd.f32 %v396, %v467
  %v493 = vadd.f32 %v397, %v472
  %v494 = vadd.f32 %v398, %v477
  %v495 = vmax.f32 %v479, 0.0
  %v496 = vmax.f32 %v480, 0.0
  %v497 = vmax.f32 %v481, 0.0
  %v498 = vmax.f32 %v482, 0.0
  %v499 = vmax.f32 %v483, 0.0
  %v500 = vmax.f32 %v484, 0.0
  %v501 = vmax.f32 %v485, 0.0
  %v502 = vmax.f32 %v486, 0.0
  %v503 = vmax.f32 %v487, 0.0
  %v504 = vmax.f32 %v488, 0.0
  %v505 = vmax.f32 %v489, 0.0
  %v506 = vmax.f32 %v490, 0.0
  %v507 = vmax.f32 %v491, 0.0
  %v508 = vmax.f32 %v492, 0.0
  %v509 = vmax.f32 %v493, 0.0
  %v510 = vmax.f32 %v494, 0.0
  %511 = vst.msk [vmem:[%s3] sm:$0xff] %vm62, %v495
  %512 = vst.msk [vmem:[%s3 + $0x8] sm:$0xff] %vm62, %v496
  %513 = vst.msk [vmem:[%s3 + $0x10] sm:$0xff] %vm62, %v497
  %514 = vst.msk [vmem:[%s3 + $0x18] sm:$0xff] %vm62, %v498
  %515 = vst.msk [vmem:[%s3 + $0x20] sm:$0xff] %vm62, %v499
  %516 = vst.msk [vmem:[%s3 + $0x28] sm:$0xff] %vm62, %v500
  %517 = vst.msk [vmem:[%s3 + $0x30] sm:$0xff] %vm62, %v501
  %518 = vst.msk [vmem:[%s3 + $0x38] sm:$0xff] %vm62, %v502
  %519 = vst.msk [vmem:[%s3 + $0x40] sm:$0xff] %vm62, %v503
  %520 = vst.msk [vmem:[%s3 + $0x48] sm:$0xff] %vm62, %v504
  %521 = vst.msk [vmem:[%s3 + $0x50] sm:$0xff] %vm62, %v505
  %522 = vst.msk [vmem:[%s3 + $0x58] sm:$0xff] %vm62, %v506
  %523 = vst.msk [vmem:[%s3 + $0x60] sm:$0xff] %vm62, %v507
  %524 = vst.msk [vmem:[%s3 + $0x68] sm:$0xff] %vm62, %v508
  %525 = vst.msk [vmem:[%s3 + $0x70] sm:$0xff] %vm62, %v509
  %526 = vst.msk [vmem:[%s3 + $0x78] sm:$0xff] %vm62, %v510
  // Predicated region
  $region14: #{batchnorm_relu.1} parent=0 // pred_check
    _
  $region15: #{batchnorm_relu.1} parent=0 // pred_check_branch
    %528 = sbr.rel (0) target = $region17
  $region16: #{batchnorm_relu.1} parent=0 // pred_region
    _
  $region17: #{batchnorm_relu.1} parent=0 // pred_fallthru
    _
  // Predicated region
  $region18: #{batchnorm_relu.1} parent=0 // pred_check
    _
  $region19: #{batchnorm_relu.1} parent=0 // pred_check_branch
    %530 = sbr.rel (0) target = $region21
  $region20: #{batchnorm_relu.1} parent=0 // pred_region
    _
  $region21: #{batchnorm_relu.1} parent=0 // pred_fallthru
    _

</llo_original>
